<compile_context>
chip_gen: v7x
topology: tpu7x:2x2x1
jax: 0.10.0
libtpu: 0.0.40
codegen_flags: <defaults>
</compile_context>

<pallas_src>
import functools

import jax
import jax.numpy as jnp
from jax.experimental import pallas as pl
from jax.experimental.pallas import tpu as pltpu


def _round_up(x, m):
    return ((x + m - 1) // m) * m


def _ce_kernel(logits_ref, tgt_ref, out_ref, acc_sc, cls_sc, *, ignore_index):
    si = pl.program_id(2)  # inner spatial axis = reduction axis (last in grid)

    @pl.when(si == 0)
    def _init():
        acc_sc[...] = jnp.zeros_like(acc_sc)
        # Hoist the class-index tensor into VMEM scratch: re-reading it uses
        # the under-used vld slots instead of regenerating it on the VALU
        # every step (VALU is the first slot to bind on v7x at HBM rate).
        cls_sc[...] = jax.lax.broadcasted_iota(jnp.int32, cls_sc.shape, 0)

    x = logits_ref[0].astype(jnp.float32)      # (C, TL): classes on sublanes
    t = tgt_ref[0]                             # (1, TL) int32
    cls = cls_sc[...]                          # (C, TL) int32

    # Numerically stable log-sum-exp over the class (sublane) axis.
    m = jnp.max(x, axis=0, keepdims=True)                          # (1, TL)
    xs = x - m                                                     # (C, TL)
    lse = jnp.log(jnp.sum(jnp.exp(xs), axis=0, keepdims=True))     # (1, TL)

    # Target-logit "gather" as select-and-reduce on the already shifted
    # values:  nll = (lse + m) - x_t = lse - (x_t - m).
    # NOTE: out-of-range targets that are not ignore_index silently yield
    # nll = lse instead of raising like torch.
    tgt_shift = jnp.sum(jnp.where(cls == t, xs, 0.0),
                        axis=0, keepdims=True)                     # (1, TL)

    valid = t != ignore_index                                      # (1, TL)
    nll = jnp.where(valid, lse - tgt_shift, 0.0)                   # (1, TL)

    # Per-step reduction straight to a single value; running accumulator is
    # (1, 1) instead of (1, TL) -> no VMEM-resident vector accumulator.
    acc_sc[...] += jnp.sum(nll, axis=1, keepdims=True)

    @pl.when(si == pl.num_programs(2) - 1)
    def _finalize():
        out_ref[0, 0] = acc_sc[...]


def cross_entropy_loss(output, target, *, reduction="mean", ignore_index=-1,
                       max_block_bytes=2 << 20):
    """output: (N, C, H, W) float logits (NCHW, like PyTorch).
       target: (N, H, W) int class indices.
       Returns a scalar matching torch.nn.CrossEntropyLoss semantics."""
    assert output.shape[0] == target.shape[0], \
        "predict & target batch size don't match"
    N, C, H, W = output.shape
    HW = H * W
    itemsize = jnp.dtype(output.dtype).itemsize

    # Guard vocabulary-scale C: with TL floored at 128 the logits block would
    # blow past VMEM regardless of max_block_bytes.
    # TODO(synk): add a class-tile grid axis with an online-LSE accumulator
    # to support very large C.
    if C * itemsize * 128 > (12 << 20):
        raise NotImplementedError(
            "number of classes too large for a single-pass class axis")

    # Free reshapes only -- no HBM transpose pass.  Keep the input dtype in
    # HBM (bf16 stays bf16); the kernel casts to f32 for compute.
    logits = output.reshape(N, C, HW)
    tgt = target.reshape(N, 1, HW).astype(jnp.int32)

    # Lane-dense spatial tile sized from the byte budget (no artificial lane
    # cap): ~2 MiB per logits block keeps per-step DMA well above the fixed
    # grid-step overhead and the double-buffered pipeline within VMEM on all
    # generations (v5e/v6e/v7x) with the raised vmem limit below.
    tl_cap = max(128, (max_block_bytes // (C * itemsize)) // 128 * 128)
    TL = int(min(_round_up(HW, 128), tl_cap))

    n_tiles = -(-HW // TL)
    # Second 'parallel' spatial-chunk axis (only when it needs no extra
    # padding): lets both v7x TensorCores work even when N == 1; a no-op on
    # single-core v5e/v6e.
    S_outer = 2 if (n_tiles >= 2 and n_tiles % 2 == 0) else 1
    S_inner = n_tiles // S_outer
    HW_pad = n_tiles * TL
    if HW_pad != HW:
        # Padded positions carry ignore_index targets => contribute nothing.
        logits = jnp.pad(logits, ((0, 0), (0, 0), (0, HW_pad - HW)))
        tgt = jnp.pad(tgt, ((0, 0), (0, 0), (0, HW_pad - HW)),
                      constant_values=ignore_index)

    kernel = functools.partial(_ce_kernel, ignore_index=ignore_index)

    part_sum = pl.pallas_call(
        kernel,
        out_shape=jax.ShapeDtypeStruct((N, S_outer, 1, 1), jnp.float32),
        grid_spec=pltpu.PrefetchScalarGridSpec(
            num_scalar_prefetch=0,
            grid=(N, S_outer, S_inner),
            in_specs=[
                pl.BlockSpec((1, C, TL),
                             lambda n, so, si: (n, 0, so * S_inner + si)),
                pl.BlockSpec((1, 1, TL),
                             lambda n, so, si: (n, 0, so * S_inner + si)),
            ],
            out_specs=pl.BlockSpec((1, 1, 1, 1),
                                   lambda n, so, si: (n, so, 0, 0)),
            scratch_shapes=[
                pltpu.VMEM((1, 1), jnp.float32),   # running nll sum
                pltpu.VMEM((C, TL), jnp.int32),    # hoisted class iota
            ],
        ),
        compiler_params=pltpu.CompilerParams(
            # Batch + spatial-chunk axes are independent (per-(n, chunk)
            # partial outputs); the inner spatial axis carries the running
            # accumulator so it stays "arbitrary".
            dimension_semantics=("parallel", "parallel", "arbitrary"),
            vmem_limit_bytes=48 << 20),
    )(logits, tgt)

    loss_sum = jnp.sum(part_sum)
    # Valid count in the wrapper: reads only HW int32s per batch element
    # (<= 1/C of the logits traffic) and XLA fuses it; keeping it out of the
    # kernel halves the accumulator work.
    valid_cnt = jnp.sum(
        (target.astype(jnp.int32) != ignore_index).astype(jnp.float32))

    if reduction == "mean":
        # NOTE: 0/0 = NaN when every target is ignore_index, matching torch.
        return loss_sum / valid_cnt
    elif reduction == "sum":
        return loss_sum
    else:
        raise NotImplementedError(
            # TODO(synk): reduction='none' would need a per-element output map.
            f"reduction={reduction!r} not supported")


def _reference(output, target, ignore_index=-1):
    # pure-JAX reference for sanity checking
    N, C, H, W = output.shape
    logits = jnp.transpose(output, (0, 2, 3, 1)).reshape(-1, C).astype(jnp.float32)
    t = target.reshape(-1).astype(jnp.int32)
    logp = jax.nn.log_softmax(logits, axis=-1)
    nll = -jnp.take_along_axis(logp, jnp.clip(t, 0, C - 1)[:, None], axis=-1)[:, 0]
    valid = (t != ignore_index).astype(jnp.float32)
    return jnp.sum(nll * valid) / jnp.sum(valid)


if __name__ == "__main__":
    key = jax.random.PRNGKey(0)
    k1, k2 = jax.random.split(key)

    N, C, H, W = 2, 4, 16, 16
    logits = jax.random.normal(k1, (N, C, H, W), dtype=jnp.float32)
    target = jax.random.randint(k2, (N, H, W), minval=-1, maxval=C,
                                dtype=jnp.int32)  # includes some ignore_index=-1

    loss = cross_entropy_loss(logits, target, reduction="mean", ignore_index=-1)
    loss = jax.block_until_ready(loss)

    ref = _reference(logits, target, ignore_index=-1)
    assert jnp.allclose(loss, ref, rtol=1e-5, atol=1e-5), (loss, ref)

    print("KERNEL_OK")
</pallas_src>

<mosaic_0001>
module attributes {stable_mosaic.version = 11 : i64} {
  func.func @_ce_kernel(%arg0: i32, %arg1: i32, %arg2: i32, %arg3: memref<1x4x256xf32, #tpu.memory_space<vmem>>, %arg4: memref<1x1x256xi32, #tpu.memory_space<vmem>>, %arg5: memref<1x1x1x1xf32, #tpu.memory_space<vmem>>, %arg6: memref<1x1xf32, #tpu.memory_space<vmem>>, %arg7: memref<4x256xi32, #tpu.memory_space<vmem>>) attributes {dimension_semantics = [#tpu.dimension_semantics<parallel>, #tpu.dimension_semantics<parallel>, #tpu.dimension_semantics<arbitrary>], iteration_bounds = array<i64: 2, 1, 1>, scalar_prefetch = 0 : i64, scratch_operands = 2 : i64, tpu.core_type = #tpu.core_type<tc>, window_params = [{transform_indices = @transform_0, window_bounds = array<i64: 1, 4, 256>}, {transform_indices = @transform_1, window_bounds = array<i64: 1, 1, 256>}, {transform_indices = @transform_2, window_bounds = array<i64: 1, 1, 1, 1>}]} {
    %c0_i32 = arith.constant 0 : i32
    %0 = arith.cmpi eq, %arg2, %c0_i32 : i32
    %1 = arith.extui %0 : i1 to i32
    %c0_i32_0 = arith.constant 0 : i32
    %2 = arith.cmpi ne, %1, %c0_i32_0 : i32
    scf.if %2 {
      %cst_19 = arith.constant 0.000000e+00 : f32
      %35 = vector.broadcast %cst_19 : f32 to vector<1x1xf32>
      %c0_20 = arith.constant 0 : index
      %c0_21 = arith.constant 0 : index
      %36 = vector.load %arg6[%c0_20, %c0_21] : memref<1x1xf32, #tpu.memory_space<vmem>>, vector<1x1xf32>
      tpu.vector_store %arg6[%c0_20, %c0_21], %35 {strides = array<i32>} : memref<1x1xf32, #tpu.memory_space<vmem>>, vector<1x1xf32>,
      %37 = tpu.iota {dimensions = array<i32: 0>} : vector<4x256xi32>
      %c0_22 = arith.constant 0 : index
      %c0_23 = arith.constant 0 : index
      %38 = vector.load %arg7[%c0_22, %c0_23] : memref<4x256xi32, #tpu.memory_space<vmem>>, vector<4x256xi32>
      tpu.vector_store %arg7[%c0_22, %c0_23], %37 {strides = array<i32>} : memref<4x256xi32, #tpu.memory_space<vmem>>, vector<4x256xi32>,
    } else {
    }
    %c0 = arith.constant 0 : index
    %c0_1 = arith.constant 0 : index
    %c0_2 = arith.constant 0 : index
    %3 = vector.load %arg3[%c0, %c0_1, %c0_2] : memref<1x4x256xf32, #tpu.memory_space<vmem>>, vector<1x4x256xf32>
    %4 = vector.shape_cast %3 : vector<1x4x256xf32> to vector<4x256xf32>
    %c0_3 = arith.constant 0 : index
    %c0_4 = arith.constant 0 : index
    %c0_5 = arith.constant 0 : index
    %5 = vector.load %arg4[%c0_3, %c0_4, %c0_5] : memref<1x1x256xi32, #tpu.memory_space<vmem>>, vector<1x1x256xi32>
    %6 = vector.shape_cast %5 : vector<1x1x256xi32> to vector<1x256xi32>
    %c0_6 = arith.constant 0 : index
    %c0_7 = arith.constant 0 : index
    %7 = vector.load %arg7[%c0_6, %c0_7] : memref<4x256xi32, #tpu.memory_space<vmem>>, vector<4x256xi32>
    %cst = arith.constant dense<0xFF800000> : vector<256xf32>
    %8 = vector.multi_reduction <maximumf>, %4, %cst [0] : vector<4x256xf32> to vector<256xf32>
    %9 = vector.shape_cast %8 : vector<256xf32> to vector<1x256xf32>
    %10 = vector.broadcast %9 : vector<1x256xf32> to vector<4x256xf32>
    %11 = arith.subf %4, %10 : vector<4x256xf32>
    %12 = math.exp %11 : vector<4x256xf32>
    %cst_8 = arith.constant dense<0.000000e+00> : vector<256xf32>
    %13 = vector.multi_reduction <add>, %12, %cst_8 [0] : vector<4x256xf32> to vector<256xf32>
    %14 = vector.shape_cast %13 : vector<256xf32> to vector<1x256xf32>
    %15 = math.log %14 : vector<1x256xf32>
    %16 = vector.broadcast %6 : vector<1x256xi32> to vector<4x256xi32>
    %17 = arith.cmpi eq, %7, %16 : vector<4x256xi32>
    %cst_9 = arith.constant 0.000000e+00 : f32
    %18 = vector.broadcast %cst_9 : f32 to vector<4x256xf32>
    %19 = arith.select %17, %11, %18 : vector<4x256xi1>, vector<4x256xf32>
    %cst_10 = arith.constant dense<0.000000e+00> : vector<256xf32>
    %20 = vector.multi_reduction <add>, %19, %cst_10 [0] : vector<4x256xf32> to vector<256xf32>
    %21 = vector.shape_cast %20 : vector<256xf32> to vector<1x256xf32>
    %c-1_i32 = arith.constant -1 : i32
    %22 = vector.broadcast %c-1_i32 : i32 to vector<1x256xi32>
    %23 = arith.cmpi ne, %6, %22 : vector<1x256xi32>
    %24 = arith.subf %15, %21 : vector<1x256xf32>
    %cst_11 = arith.constant 0.000000e+00 : f32
    %25 = vector.broadcast %cst_11 : f32 to vector<1x256xf32>
    %26 = arith.select %23, %24, %25 : vector<1x256xi1>, vector<1x256xf32>
    %c0_12 = arith.constant 0 : index
    %c0_13 = arith.constant 0 : index
    %27 = vector.load %arg6[%c0_12, %c0_13] : memref<1x1xf32, #tpu.memory_space<vmem>>, vector<1x1xf32>
    %cst_14 = arith.constant dense<0.000000e+00> : vector<1xf32>
    %28 = vector.multi_reduction <add>, %26, %cst_14 [1] : vector<1x256xf32> to vector<1xf32>
    %29 = vector.shape_cast %28 : vector<1xf32> to vector<1x1xf32>
    %30 = arith.addf %27, %29 : vector<1x1xf32>
    %c0_15 = arith.constant 0 : index
    %c0_16 = arith.constant 0 : index
    %31 = vector.load %arg6[%c0_15, %c0_16] : memref<1x1xf32, #tpu.memory_space<vmem>>, vector<1x1xf32>
    tpu.vector_store %arg6[%c0_15, %c0_16], %30 {strides = array<i32>} : memref<1x1xf32, #tpu.memory_space<vmem>>, vector<1x1xf32>,
    %c0_i32_17 = arith.constant 0 : i32
    %32 = arith.cmpi eq, %arg2, %c0_i32_17 : i32
    %33 = arith.extui %32 : i1 to i32
    %c0_i32_18 = arith.constant 0 : i32
    %34 = arith.cmpi ne, %33, %c0_i32_18 : i32
    scf.if %34 {
      %c0_19 = arith.constant 0 : index
      %c0_20 = arith.constant 0 : index
      %35 = vector.load %arg6[%c0_19, %c0_20] : memref<1x1xf32, #tpu.memory_space<vmem>>, vector<1x1xf32>
      %c0_21 = arith.constant 0 : index
      %c0_22 = arith.constant 0 : index
      %c0_23 = arith.constant 0 : index
      %c0_24 = arith.constant 0 : index
      %36 = vector.load %arg5[%c0_21, %c0_22, %c0_23, %c0_24] : memref<1x1x1x1xf32, #tpu.memory_space<vmem>>, vector<1x1x1x1xf32>
      %37 = vector.shape_cast %36 : vector<1x1x1x1xf32> to vector<1x1xf32>
      %38 = vector.shape_cast %35 : vector<1x1xf32> to vector<1x1x1x1xf32>
      tpu.vector_store %arg5[%c0_21, %c0_22, %c0_23, %c0_24], %38 {strides = array<i32>} : memref<1x1x1x1xf32, #tpu.memory_space<vmem>>, vector<1x1x1x1xf32>,
    } else {
    }
    return
  }
  func.func @transform_0(%arg0: i32, %arg1: i32, %arg2: i32) -> (i32, i32, i32) {
    %c1_i32 = arith.constant 1 : i32
    %0 = arith.muli %arg1, %c1_i32 : i32
    %1 = arith.addi %0, %arg2 : i32
    %c0_i32 = arith.constant 0 : i32
    %c0_i32_0 = arith.constant 0 : i32
    return %arg0, %c0_i32, %1 : i32, i32, i32
  }
  func.func @transform_1(%arg0: i32, %arg1: i32, %arg2: i32) -> (i32, i32, i32) {
    %c1_i32 = arith.constant 1 : i32
    %0 = arith.muli %arg1, %c1_i32 : i32
    %1 = arith.addi %0, %arg2 : i32
    %c0_i32 = arith.constant 0 : i32
    %c0_i32_0 = arith.constant 0 : i32
    return %arg0, %c0_i32, %1 : i32, i32, i32
  }
  func.func @transform_2(%arg0: i32, %arg1: i32, %arg2: i32) -> (i32, i32, i32, i32) {
    %c0_i32 = arith.constant 0 : i32
    %c0_i32_0 = arith.constant 0 : i32
    %c0_i32_1 = arith.constant 0 : i32
    return %arg0, %arg1, %c0_i32, %c0_i32_0 : i32, i32, i32, i32
  }
}

</mosaic_0001>

<llo_original>
// kernel: tpu_custom_call.1
$region0: #{tpu_custom_call.1}
  #allocation0 [shape = 'u32[]', space=smem, size = 0x4, offset = 0x4, fixed_abs, tag = 'smem constant byte address 0x4 - core index']
  #allocation1 [shape = 'u32[144,128]{1,0:T(1,128)}', space=vmem, size = 0x12000, scoped, tag = 'internal scratch']
  #allocation2 [shape = 'f32[1,1]{1,0:T(1,128)}', space=vmem, size = 0x200, scoped, tag = 'scratch operand']
  #allocation3 [shape = 's32[4,256]{1,0:T(4,128)}', space=vmem, size = 0x1000, scoped, tag = 'scratch operand']
  %s0 = inlined_call_operand.hbm [shape: f32[2,4,256], index: 0, kind: input, shape index: {}]
  %s1 = inlined_call_operand.hbm [shape: s32[2,1,256], index: 1, kind: input, shape index: {}]
  %s2 = inlined_call_operand.vmem [shape: f32[2,1,1,1], index: 2, kind: output, shape index: {}]
  %s3 = sld [smem:[#allocation0]]
  $region57: #{tpu_custom_call.1} parent=0
    _
  %s5 = ssub.s32 1, %s3
  %s6 = scalar_select 0, %s5, %s3
  $region1: #{tpu_custom_call.1} parent=0
    #allocation4 [shape = 'u8[8192]{0}', space=vmem, size = 0x2000, scoped, tag = 'input window, operand 0']
    #allocation5 [shape = 's32[2]{0}', space=sflag, size = 0x8, scoped, tag = 'scoped memory for tpu_custom_call.1']
    #allocation6 [shape = 'u8[2048]{0}', space=vmem, size = 0x800, scoped, tag = 'input window, operand 1']
    #allocation7 [shape = 's32[2]{0}', space=sflag, size = 0x8, scoped, tag = 'scoped memory for tpu_custom_call.1']
    %7 = vsyncpa [#allocation5], 0
    %s8 = scalar_lea.sflag [#allocation5], 1
    %9 = vsyncpa %s8, 0
    %10 = vsyncpa [#allocation7], 0
    %s11 = scalar_lea.sflag [#allocation7], 1
    %12 = vsyncpa %s11, 0
    loop: start=0, step=1, limit=4
    $region2: #{tpu_custom_call.1} parent=1 // loop_pre_header
      _
    $region3: #{tpu_custom_call.1} parent=1 // loop_header
      %s14 = sphi 0, %s18
      %p15 = scmp.ge.s32.totalorder %s14, 4
      %s21 = sphi 0, %s40
      %s22 = sphi 0, %s36
      %s23 = sphi 0, %s32
      %s24 = sphi 0, %s21
      %s25 = sphi 0, %s22
      %s26 = sphi 0, %s23
      %s27 = sphi 0, %s24
      %s28 = sphi 0, %s25
      %s29 = sphi 0, %s26
      %s47 = sphi 0, %s49
      %s50 = sphi 0, %s47
      %s51 = sphi 0, %s50
      %s67 = sphi 0, %s51
      %s77 = sphi 0, %s79
      %s80 = sphi 0, %s77
      %s81 = sphi 0, %s80
      %s97 = sphi 0, %s81
      %s105 = sphi 0, %s107
      %s108 = sphi 0, %s105
      %s109 = sphi 0, %s108
      %s125 = sphi 0, %s109
    $region4: #{tpu_custom_call.1} parent=1 // loop_header_branch
      %17 = sbr.rel (%p15) target = $region8
    $region5: #{tpu_custom_call.1} parent=1 // loop_body
      %s19 = ssub.s32 %s14, 1
      %s20 = ssub.s32 %s14, 2
      %s30 = sadd.s32 1, %s23
      %p31 = scmp.ge.s32.totalorder %s30, 1
      %s32 = scalar_select %p31, 0, %s30
      %s33 = sadd.s32 1, %s22
      %s34 = scalar_select %p31, %s33, %s22
      %p35 = scmp.ge.s32.totalorder %s34, 1
      %s36 = scalar_select %p35, 0, %s34
      %s37 = sadd.s32 1, %s21
      %s38 = scalar_select %p35, %s37, %s21
      %p39 = scmp.ge.s32.totalorder %s38, 2
      %s40 = scalar_select %p39, 0, %s38
      %s41 = sadd.s32 %s22, %s23
      %s42 = sadd.s32 %s36, %s32
      %s43 = ssub.s32 %s21, %s40
      %s44 = ssub.s32 %s41, %s42
      %s45 = sor.u32 %s43, %s44
      %p46 = scmp.eq.s32.totalorder %s45, 0
      %s48 = sadd.s32 %s47, 1
      %s49 = scalar_select %p46, %s47, %s48
      %p52 = pneg %p46
      %p53 = scmp.eq.s32.totalorder %s14, 1
      %p54 = por %p52, %p53
      %p55 = scmp.ne.s32.totalorder %s47, %s50
      %p56 = scmp.eq.s32.totalorder %s14, 0
      %p57 = por %p55, %p56
      %p58 = scmp.ne.s32.totalorder %s47, %s50
      %p59 = scmp.eq.s32.totalorder %s19, 1
      %p60 = por %p58, %p59
      %p61 = scmp.ne.s32.totalorder %s50, %s51
      %p62 = scmp.eq.s32.totalorder %s19, 0
      %p63 = por %p61, %p62
      %p64 = scmp.ne.s32.totalorder %s50, %s51
      %p65 = scmp.eq.s32.totalorder %s20, 1
      %p66 = por %p64, %p65
      %p68 = scmp.ne.s32.totalorder %s51, %s67
      %p69 = scmp.eq.s32.totalorder %s20, 0
      %p70 = por %p68, %p69
      %s71 = sadd.s32 %s22, %s23
      %s72 = sadd.s32 %s36, %s32
      %s73 = ssub.s32 %s21, %s40
      %s74 = ssub.s32 %s71, %s72
      %s75 = sor.u32 %s73, %s74
      %p76 = scmp.eq.s32.totalorder %s75, 0
      %s78 = sadd.s32 %s77, 1
      %s79 = scalar_select %p76, %s77, %s78
      %p82 = pneg %p76
      %p83 = scmp.eq.s32.totalorder %s14, 1
      %p84 = por %p82, %p83
      %p85 = scmp.ne.s32.totalorder %s77, %s80
      %p86 = scmp.eq.s32.totalorder %s14, 0
      %p87 = por %p85, %p86
      %p88 = scmp.ne.s32.totalorder %s77, %s80
      %p89 = scmp.eq.s32.totalorder %s19, 1
      %p90 = por %p88, %p89
      %p91 = scmp.ne.s32.totalorder %s80, %s81
      %p92 = scmp.eq.s32.totalorder %s19, 0
      %p93 = por %p91, %p92
      %p94 = scmp.ne.s32.totalorder %s80, %s81
      %p95 = scmp.eq.s32.totalorder %s20, 1
      %p96 = por %p94, %p95
      %p98 = scmp.ne.s32.totalorder %s81, %s97
      %p99 = scmp.eq.s32.totalorder %s20, 0
      %p100 = por %p98, %p99
      %s101 = ssub.s32 %s21, %s40
      %s102 = ssub.s32 %s22, %s36
      %s103 = sor.u32 %s101, %s102
      %p104 = scmp.eq.s32.totalorder %s103, 0
      %s106 = sadd.s32 %s105, 1
      %s107 = scalar_select %p104, %s105, %s106
      %p110 = pneg %p104
      %p111 = scmp.eq.s32.totalorder %s14, 1
      %p112 = por %p110, %p111
      %p113 = scmp.ne.s32.totalorder %s105, %s108
      %p114 = scmp.eq.s32.totalorder %s14, 0
      %p115 = por %p113, %p114
      %p116 = scmp.ne.s32.totalorder %s105, %s108
      %p117 = scmp.eq.s32.totalorder %s19, 1
      %p118 = por %p116, %p117
      %p119 = scmp.ne.s32.totalorder %s108, %s109
      %p120 = scmp.eq.s32.totalorder %s19, 0
      %p121 = por %p119, %p120
      %p122 = scmp.ne.s32.totalorder %s108, %s109
      %p123 = scmp.eq.s32.totalorder %s20, 1
      %p124 = por %p122, %p123
      %p126 = scmp.ne.s32.totalorder %s109, %s125
      %p127 = scmp.eq.s32.totalorder %s20, 0
      %p128 = por %p126, %p127
      %p129 = scmp.le.s32.totalorder 1, %s14
      %p130 = scmp.lt.s32.totalorder %s14, 3
      %p131 = pnand %p129, %p130
      %p132 = pneg %p131
      // Predicated region
      $region9: #{tpu_custom_call.1} parent=5 // pred_check
        _
      $region10: #{tpu_custom_call.1} parent=5 // pred_check_branch
        %134 = sbr.rel (%p131) target = $region12
      $region11: #{tpu_custom_call.1} parent=5 // pred_region
        %s135 = ssub.s32 %s14, 1
      $region12: #{tpu_custom_call.1} parent=5 // pred_fallthru
        _
      %p136 = scmp.lt.s32.totalorder %s14, 2
      // Predicated region
      $region13: #{tpu_custom_call.1} parent=5 // pred_check
        %p137 = pneg %p136
      $region14: #{tpu_custom_call.1} parent=5 // pred_check_branch
        %139 = sbr.rel (%p137) target = $region16
      $region15: #{tpu_custom_call.1} parent=5 // pred_region
        // Predicated region
        $region17: #{tpu_custom_call.1} parent=15 // pred_check
          %p140 = pneg %p57
        $region18: #{tpu_custom_call.1} parent=15 // pred_check_branch
          %142 = sbr.rel (%p140) target = $region20
        $region19: #{tpu_custom_call.1} parent=15 // pred_region
          %s143 = sand.u32 %s47, 1
          %s144 = scalar_lea.sflag [#allocation5], %s143
          %s145 = sand.u32 %s47, 1
          %s146 = smul.addr %s145, 8
          %s147 = scalar_lea.vmem [#allocation4], %s146
          %s148 = sadd.s32 %s22, %s23
          %s149 = smul.u32 2, %s148
          %s151 = ssub.s32 128, 128
          %152 = vsyncadd %s144, %s151
          %s153 = smul.addr %s21, 2
          %s154 = sadd.s32 %s149, %s153
          %s155 = smul.addr %s154, 64
          %s156 = scalar_lea.hbm %s0, %s155
          %s158 = sshll.u32 %s147, 4
          %s159 = int_to_ptr.vmem [resolvable:$true] %s158
          %161 = dma.hbm_to_vmem [thread:$0]  %s156, 128, %s159, %s144
        $region20: #{tpu_custom_call.1} parent=15 // pred_fallthru
          _
        // Predicated region
        $region21: #{tpu_custom_call.1} parent=15 // pred_check
          %p162 = pneg %p87
        $region22: #{tpu_custom_call.1} parent=15 // pred_check_branch
          %164 = sbr.rel (%p162) target = $region24
        $region23: #{tpu_custom_call.1} parent=15 // pred_region
          %s165 = sand.u32 %s77, 1
          %s166 = scalar_lea.sflag [#allocation7], %s165
          %s167 = sand.u32 %s77, 1
          %s168 = smul.addr %s167, 2
          %s169 = scalar_lea.vmem [#allocation6], %s168
          %s170 = sadd.s32 %s22, %s23
          %s171 = smul.u32 2, %s170
          %s173 = ssub.s32 32, 32
          %174 = vsyncadd %s166, %s173
          %s175 = smul.addr %s21, 2
          %s176 = sadd.s32 %s171, %s175
          %s177 = smul.addr %s176, 16
          %s178 = scalar_lea.hbm %s1, %s177
          %s180 = sshll.u32 %s169, 4
          %s181 = int_to_ptr.vmem [resolvable:$true] %s180
          %183 = dma.hbm_to_vmem [thread:$0]  %s178, 32, %s181, %s166
        $region24: #{tpu_custom_call.1} parent=15 // pred_fallthru
          _
      $region16: #{tpu_custom_call.1} parent=5 // pred_fallthru
        _
      %p184 = scmp.le.s32.totalorder 1, %s14
      %p185 = scmp.lt.s32.totalorder %s14, 3
      %p186 = pnand %p184, %p185
      %p187 = pneg %p186
      // Predicated region
      $region25: #{tpu_custom_call.1} parent=5 // pred_check
        _
      $region26: #{tpu_custom_call.1} parent=5 // pred_check_branch
        %189 = sbr.rel (%p186) target = $region28
      $region27: #{tpu_custom_call.1} parent=5 // pred_region
        %s190 = ssub.s32 %s14, 1
        %s191 = sand.u32 %s50, 1
        %s192 = scalar_lea.sflag [#allocation5], %s191
        %s193 = sand.u32 %s50, 1
        %s194 = smul.addr %s193, 8
        %s195 = scalar_lea.vmem [#allocation4], %s194
        // Predicated region
        $region29: #{tpu_custom_call.1} parent=27 // pred_check
          %p196 = pneg %p63
        $region30: #{tpu_custom_call.1} parent=27 // pred_check_branch
          %198 = sbr.rel (%p196) target = $region32
        $region31: #{tpu_custom_call.1} parent=27 // pred_region
          %199 = dma.done %s192, 128
        $region32: #{tpu_custom_call.1} parent=27 // pred_fallthru
          _
        %s200 = sand.u32 %s80, 1
        %s201 = scalar_lea.sflag [#allocation7], %s200
        %s202 = sand.u32 %s80, 1
        %s203 = smul.addr %s202, 2
        %s204 = scalar_lea.vmem [#allocation6], %s203
        // Predicated region
        $region33: #{tpu_custom_call.1} parent=27 // pred_check
          %p205 = pneg %p93
        $region34: #{tpu_custom_call.1} parent=27 // pred_check_branch
          %207 = sbr.rel (%p205) target = $region36
        $region35: #{tpu_custom_call.1} parent=27 // pred_region
          %208 = dma.done %s201, 32
        $region36: #{tpu_custom_call.1} parent=27 // pred_fallthru
          _
        %s209 = sand.u32 %s50, 1
        %s210 = scalar_lea.sflag [#allocation5], %s209
        %s211 = sand.u32 %s50, 1
        %s212 = smul.addr %s211, 8
        %s213 = scalar_lea.vmem [#allocation4], %s212
        %p214 = pneg %p63
        %p215 = pneg %p60
        %s216 = sand.u32 %s80, 1
        %s217 = scalar_lea.sflag [#allocation7], %s216
        %s218 = sand.u32 %s80, 1
        %s219 = smul.addr %s218, 2
        %s220 = scalar_lea.vmem [#allocation6], %s219
        %p221 = pneg %p93
        %p222 = pneg %p90
        %p223 = pneg %p121
        %p224 = pneg %p118
        %p225 = scmp.lt.s32.totalorder %s24, 1
        %s226 = scalar_select %p225, %s24, 1
        %p227 = scmp.lt.s32.totalorder %s25, 0
        %s228 = scalar_select %p227, %s25, 0
        %s229 = sadd.s32 %s228, %s226
        %s230 = scalar_lea.vmem %s2, %s229
        %s231 = sadd.s32 %s25, %s26
        %s232 = smul.u32 2, %s231
        %s233 = sadd.s32 %s25, %s26
        %s234 = smul.u32 2, %s233
        %p235 = scmp.lt.s32.totalorder %s24, 1
        %s236 = scalar_select %p235, %s24, 1
        %p237 = scmp.lt.s32.totalorder %s25, 0
        %s238 = scalar_select %p237, %s25, 0
        %s239 = sadd.s32 %s238, %s236
        %s240 = scalar_lea.vmem %s2, %s239
        %p241 = scmp.eq.s32.totalorder %s26, 0
        // Predicated region
        $region37: #{tpu_custom_call.1} parent=27 // pred_check
          %p242 = pneg %p241
        $region38: #{tpu_custom_call.1} parent=27 // pred_check_branch
          %244 = sbr.rel (%p242) target = $region40
        $region39: #{tpu_custom_call.1} parent=27 // pred_region
          %vm245 = vcmask 0
          %246 = vst.msk [vmem:[#allocation2] sm:$0x1] %vm245, 0.0
          %v247 = vlaneseq
          %v248 = vshrl.u32 %v247, 7
          %v250 = vunpack.c.l.s4 839922192
          %v251 = vunpack.c.0.s8 %v250
          %v252 = vlaneseq
          %v253 = vshrl.u32 %v252, 7
          %v254 = vsub.s32 %v251, %v253
          %v255 = vrot.slane %v248, %v254
          %256 = vst [vmem:[#allocation3] sm:$0xff] %v255
        $region40: #{tpu_custom_call.1} parent=27 // pred_fallthru
          _
        %v257 = vld [vmem:[%s195] sm:$0xff]
        %v258 = vld [vmem:[%s204] sm:$0x3]
        %v259 = vld [vmem:[#allocation3] sm:$0xff]
        %v261 = vcombine.high %v257, %v257
        %vm263 = vcmask 1043456
        %v264 = vsel %vm263, %v257, -inf
        %v265 = vrot.slane %v264, 4
        %v266 = vmax.f32 %v264, %v265
        %v267 = vrot.slane %v266, 2
        %v268 = vmax.f32 %v266, %v267
        %v269 = vrot.slane %v268, 1
        %v270 = vmax.f32 %v268, %v269
        %v271 = vsel %vm263, %v261, -inf
        %v272 = vrot.slane %v271, 4
        %v273 = vmax.f32 %v271, %v272
        %v274 = vrot.slane %v273, 2
        %v275 = vmax.f32 %v273, %v274
        %v276 = vrot.slane %v275, 1
        %v277 = vmax.f32 %v275, %v276
        %v280 = vcombine.low %v270, %v277
        %v282 = vsub.f32 %v257, %v280
        %v283 = vmul.f32 %v282, 1.442695
        %v284 = vpow.pop %v283
        %v286 = vcombine.high %v284, %v284
        %v288 = vsel %vm263, %v284, 0.0
        %v289 = vrot.slane %v288, 4
        %v290 = vadd.f32 %v288, %v289
        %v291 = vrot.slane %v290, 2
        %v292 = vadd.f32 %v290, %v291
        %v293 = vrot.slane %v292, 1
        %v294 = vadd.f32 %v292, %v293
        %v295 = vsel %vm263, %v286, 0.0
        %v296 = vrot.slane %v295, 4
        %v297 = vadd.f32 %v295, %v296
        %v298 = vrot.slane %v297, 2
        %v299 = vadd.f32 %v297, %v298
        %v300 = vrot.slane %v299, 1
        %v301 = vadd.f32 %v299, %v300
        %v302 = vlog2.pop %v294
        %v303 = vmul.f32 %v302, 0.6931472
        %v304 = vlog2.pop %v301
        %v305 = vmul.f32 %v304, 0.6931472
        %v306 = vlaneseq
        %v307 = vshrl.u32 %v306, 7
        %v308 = vsub.s32 0, %v307
        %v309 = vrot.slane %v258, %v308
        %v310 = vlaneseq
        %v311 = vshrl.u32 %v310, 7
        %v312 = vsub.s32 1, %v311
        %v313 = vrot.slane %v258, %v312
        %v314 = vcombine.low %v309, %v313
        %vm315 = vcmp.eq.s32.totalorder %v259, %v314
        %v316 = vsel %vm315, %v282, 0.0
        %v318 = vcombine.high %v316, %v316
        %v320 = vsel %vm263, %v316, 0.0
        %v321 = vrot.slane %v320, 4
        %v322 = vadd.f32 %v320, %v321
        %v323 = vrot.slane %v322, 2
        %v324 = vadd.f32 %v322, %v323
        %v325 = vrot.slane %v324, 1
        %v326 = vadd.f32 %v324, %v325
        %v327 = vsel %vm263, %v318, 0.0
        %v328 = vrot.slane %v327, 4
        %v329 = vadd.f32 %v327, %v328
        %v330 = vrot.slane %v329, 2
        %v331 = vadd.f32 %v329, %v330
        %v332 = vrot.slane %v331, 1
        %v333 = vadd.f32 %v331, %v332
        %vm334 = vcmp.ne.s32.totalorder %v258, 4294967295
        %v335 = vsub.f32 %v303, %v326
        %v336 = vsub.f32 %v305, %v333
        %v339 = vcombine.low %v335, %v336
        %v341 = vunpack.c.l.s4 1966171168
        %v342 = vunpack.c.0.s8 %v341
        %v343 = vlaneseq
        %v344 = vshrl.u32 %v343, 7
        %v345 = vsub.s32 %v342, %v344
        %v346 = vrot.slane %v339, %v345
        %v348 = vunpack.c.l.s4 1966171168
        %v349 = vunpack.c.0.s8 %v348
        %v350 = vlaneseq
        %v351 = vshrl.u32 %v350, 7
        %v352 = vsub.s32 %v349, %v351
        %v353 = vrot.slane %v346, %v352
        %v355 = vsel %vm334, %v353, 0.0
        %v356 = vld [vmem:[#allocation2] sm:$0x1]
        %v358 = vlaneseq
        %v359 = vshrl.u32 %v358, 7
        %v360 = vsub.s32 0, %v359
        %v361 = vrot.slane %v355, %v360
        %v362 = vlaneseq
        %v363 = vshrl.u32 %v362, 7
        %v364 = vsub.s32 1, %v363
        %v365 = vrot.slane %v355, %v364
        %vm368 = vcmask 1040384
        %v369 = vsel %vm368, %v361, 0.0
        %v370 = vsel %vm368, %v365, 0.0
        %v371 = vadd.f32 %v369, %v370
        %372 = vadd.xlane.f32.xlu0 %v371
        %v373 = vpop.xlane.xlu0 %372
        %v374 = vadd.f32 %v356, %v373
        %vm375 = vcmask 0
        %376 = vst.msk [vmem:[#allocation2] sm:$0x1] %vm375, %v374
        // Predicated region
        $region41: #{tpu_custom_call.1} parent=27 // pred_check
          %p377 = pneg %p241
        $region42: #{tpu_custom_call.1} parent=27 // pred_check_branch
          %379 = sbr.rel (%p377) target = $region44
        $region43: #{tpu_custom_call.1} parent=27 // pred_region
          %v380 = vld [vmem:[#allocation2] sm:$0x1]
          %381 = vst.msk [vmem:[%s240] sm:$0x1] %vm375, %v380
        $region44: #{tpu_custom_call.1} parent=27 // pred_fallthru
          _
        %p382 = scmp.lt.s32.totalorder %s24, 1
        %s383 = scalar_select %p382, %s24, 1
        %p384 = scmp.lt.s32.totalorder %s25, 0
        %s385 = scalar_select %p384, %s25, 0
        %s386 = sadd.s32 %s385, %s383
        %s387 = scalar_lea.vmem %s2, %s386
        // Predicated region
        $region45: #{tpu_custom_call.1} parent=27 // pred_check
          %p388 = pneg %p118
        $region46: #{tpu_custom_call.1} parent=27 // pred_check_branch
          %390 = sbr.rel (%p388) target = $region48
        $region47: #{tpu_custom_call.1} parent=27 // pred_region
          _
        $region48: #{tpu_custom_call.1} parent=27 // pred_fallthru
          _
      $region28: #{tpu_custom_call.1} parent=5 // pred_fallthru
        _
      %p391 = scmp.le.s32.totalorder 2, %s14
      // Predicated region
      $region49: #{tpu_custom_call.1} parent=5 // pred_check
        %p392 = pneg %p391
      $region50: #{tpu_custom_call.1} parent=5 // pred_check_branch
        %394 = sbr.rel (%p392) target = $region52
      $region51: #{tpu_custom_call.1} parent=5 // pred_region
        %s395 = ssub.s32 %s14, 2
        // Predicated region
        $region53: #{tpu_custom_call.1} parent=51 // pred_check
          %p396 = pneg %p124
        $region54: #{tpu_custom_call.1} parent=51 // pred_check_branch
          %398 = sbr.rel (%p396) target = $region56
        $region55: #{tpu_custom_call.1} parent=51 // pred_region
          %p399 = scmp.lt.s32.totalorder %s27, 1
          %s400 = scalar_select %p399, %s27, 1
          %p401 = scmp.lt.s32.totalorder %s28, 0
          %s402 = scalar_select %p401, %s28, 0
          %s403 = sadd.s32 %s402, %s400
          %s404 = scalar_lea.vmem %s2, %s403
        $region56: #{tpu_custom_call.1} parent=51 // pred_fallthru
          _
      $region52: #{tpu_custom_call.1} parent=5 // pred_fallthru
        _
    $region6: #{tpu_custom_call.1} parent=1 // loop_footer
      %s18 = sadd.s32 1, %s14
    $region7: #{tpu_custom_call.1} parent=1 // loop_footer_branch
      %13 = sbr.rel target = $region3
    $region8: #{tpu_custom_call.1} parent=1 // loop_exit
      _
    %405 = vsyncpa [#allocation5], 1
    %s406 = scalar_lea.sflag [#allocation5], 1
    %407 = vsyncpa %s406, 1
    %408 = vsyncpa [#allocation7], 1
    %s409 = scalar_lea.sflag [#allocation7], 1
    %410 = vsyncpa %s409, 1

</llo_original>
